<compile_context>
chip_gen: v5e
topology: v5e:2x2
jax: 0.10.0
libtpu: 0.0.40
codegen_flags: <defaults>
</compile_context>

<pallas_src>
import functools
import math

import jax
import jax.numpy as jnp
from jax.experimental import pallas as pl
from jax.experimental.pallas import tpu as pltpu


_STEPS_TARGET = 8       # >= 8 grid steps: v7x megacore + pipeline depth
_ROW_TILE_FLOOR = 512   # 512-row tiles already sit at ~85% of HBM roofline
_LANE_TILE_FLOOR = 512
_PACK_MAX_LANES = 512   # cap packed row width (keeps reduce/expand matmuls tiny)


# --------------------------------------------------------------------------
# Tile sizing helpers
# --------------------------------------------------------------------------

def _round_up(x, m):
    return -(-x // m) * m


def _sublane_multiple(dtype):
    """Minimum second-minor tile multiple for this dtype (sublane packing)."""
    bits = jnp.dtype(dtype).itemsize * 8
    if bits >= 32:
        return 8
    if bits == 16:
        return 16
    return 32


def _physical_vmem_bytes():
    try:
        return int(pltpu.get_tpu_info().vmem_capacity_bytes)
    except Exception:
        return 64 << 20  # conservative: v7x per-TC VMEM


def _vmem_limit_for(footprint_bytes):
    """Scoped-VMEM limit sized to the actual per-step footprint (+ margin)."""
    hard_cap = min((_physical_vmem_bytes() * 3) // 4, 96 << 20)
    want = int(footprint_bytes) + (4 << 20)
    return int(max(16 << 20, min(want, hard_cap)))


def _pick_row_block(n, dtype, c_eff, tile_budget):
    """Rows per tile for the (rows, C_eff) kernels.

    Fit: in + out tiles, double-buffered each.  Cap: keep >= _STEPS_TARGET
    grid steps (with a ~512-row floor so per-step overhead stays amortized).
    Alignment: dtype-aware sublane multiple (8 / 16 / 32).
    """
    align = _sublane_multiple(dtype)
    item = jnp.dtype(dtype).itemsize
    per_row_bytes = 2 * c_eff * item * 2          # in+out, double-buffered
    bm_fit = max(align, tile_budget // max(per_row_bytes, 1))
    step_cap = max(_ROW_TILE_FLOOR,
                   _round_up(pl.cdiv(n, _STEPS_TARGET), align))
    bm = min(bm_fit, step_cap, n)
    if bm < n:
        bm = max(align, (bm // align) * align)    # multiple of align unless full extent
    return bm


def _pick_spatial_tile(s, c, batch, dtype, tile_budget):
    """Spatial (lane) tile for the channels_first kernel.

    Cap ts so batch * cdiv(s, ts) >= _STEPS_TARGET (ts multiple of 128,
    ~512-lane floor); otherwise the grid collapses to (B, 1) and one v7x
    TensorCore idles with zero pipelining.
    """
    item = jnp.dtype(dtype).itemsize
    per_col_bytes = 2 * c * item * 2              # in+out, double-buffered
    t_fit = max(128, (tile_budget // max(per_col_bytes, 1)) // 128 * 128)
    spatial_steps = max(1, -(-_STEPS_TARGET // max(batch, 1)))
    step_cap = max(_LANE_TILE_FLOOR, (pl.cdiv(s, spatial_steps) // 128) * 128)
    t = min(t_fit, step_cap, 1 << 15)
    if s <= t:
        return s                                  # full extent: always legal
    return max(128, t)                            # multiple of 128; edge block masked


# --------------------------------------------------------------------------
# Kernels
# --------------------------------------------------------------------------

def _ln_rows_kernel(x_ref, w_ref, b_ref, o_ref, *, eps):
    """Per-row LayerNorm over the lane (last) axis.  x_ref: (bm, C)."""
    x = x_ref[...].astype(jnp.float32)
    mean = jnp.mean(x, axis=-1, keepdims=True)
    centered = x - mean
    # Two-pass biased variance (matches torch).  One-pass E[x^2]-mean^2 only
    # pays if a bundle dump shows VALU/XLU (not HBM) as the binding slot.
    var = jnp.mean(centered * centered, axis=-1, keepdims=True)
    inv = jax.lax.rsqrt(var + eps)                # EUP, ~free
    y = centered * inv * w_ref[...] + b_ref[...]
    o_ref[...] = y.astype(o_ref.dtype)


def _ln_rows_packed_kernel(x_ref, w_ref, b_ref, red_ref, exp_ref, o_ref, *, eps):
    """G logical rows of width c packed per kernel row (lanes = G*c, mult. of 128).

    Per-logical-row statistics via tiny MXU matmuls (MXU is otherwise idle):
      reduce:  (bm, L) @ (L, G)   red[j, g] = 1/c if j//c == g  -> segment mean/var
      expand:  (bm, G) @ (G, L)   exp[g, j] = 1   if j//c == g  -> broadcast to lanes
    No XLU cross-lane reductions, no per-group select/add chains.
    """
    x = x_ref[...].astype(jnp.float32)
    red = red_ref[...]
    exp = exp_ref[...]
    mean_seg = jnp.dot(x, red, preferred_element_type=jnp.float32)       # (bm, G)
    mean = jnp.dot(mean_seg, exp, preferred_element_type=jnp.float32)    # (bm, L)
    centered = x - mean
    var_seg = jnp.dot(centered * centered, red,
                      preferred_element_type=jnp.float32)                # (bm, G)
    inv_seg = jax.lax.rsqrt(var_seg + eps)                               # EUP, tiny
    inv = jnp.dot(inv_seg, exp, preferred_element_type=jnp.float32)      # (bm, L)
    y = centered * inv * w_ref[...] + b_ref[...]
    o_ref[...] = y.astype(o_ref.dtype)


def _ln_cfirst_kernel(x_ref, w_ref, b_ref, o_ref, *, eps):
    """channels_first LayerNorm: x_ref (1, C, tile_s); reduce over the channel
    (sublane) axis, spatial axis stays lane-dense.  No transposes anywhere."""
    x = x_ref[...].astype(jnp.float32)
    mean = jnp.mean(x, axis=1, keepdims=True)
    centered = x - mean
    var = jnp.mean(centered * centered, axis=1, keepdims=True)
    inv = jax.lax.rsqrt(var + eps)
    y = centered * inv * w_ref[...] + b_ref[...]
    o_ref[...] = y.astype(o_ref.dtype)


# --------------------------------------------------------------------------
# pallas_call wrappers
# --------------------------------------------------------------------------

def _layernorm_rows(x2d, consts, kernel, flops_per_elem):
    """x2d: (N, C_eff); normalize per kernel row with the supplied kernel.

    `consts` are grid-invariant operands (affine params, reduce/expand
    matrices); their block index never changes so they are not re-fetched.
    """
    n, c_eff = x2d.shape
    item = jnp.dtype(x2d.dtype).itemsize
    tile_budget = min(_physical_vmem_bytes() // 4, 32 << 20)
    bm = _pick_row_block(n, x2d.dtype, c_eff, tile_budget)
    grid = (pl.cdiv(n, bm),)  # no host-side padding; edge block masked by Pallas

    in_specs = [pl.BlockSpec((bm, c_eff), lambda i: (i, 0))]
    for a in consts:
        in_specs.append(
            pl.BlockSpec(a.shape, lambda i, _nd=a.ndim: (0,) * _nd))

    extra_bytes = sum(int(a.size) * jnp.dtype(a.dtype).itemsize for a in consts)
    footprint = 4 * bm * c_eff * item + 2 * extra_bytes
    cost = pl.CostEstimate(
        flops=int(flops_per_elem * n * c_eff),
        transcendentals=int(n),
        bytes_accessed=int(2 * n * c_eff * item + extra_bytes),
    )

    return pl.pallas_call(
        kernel,
        out_shape=jax.ShapeDtypeStruct((n, c_eff), x2d.dtype),
        grid_spec=pltpu.PrefetchScalarGridSpec(
            num_scalar_prefetch=0,
            grid=grid,
            in_specs=in_specs,
            out_specs=pl.BlockSpec((bm, c_eff), lambda i: (i, 0)),
        ),
        compiler_params=pltpu.CompilerParams(
            dimension_semantics=("parallel",),
            vmem_limit_bytes=_vmem_limit_for(footprint),
        ),
        cost_estimate=cost,
    )(x2d, *consts)


def _layernorm_channels_last(x, weight, bias, eps):
    c = x.shape[-1]
    x2 = x.reshape(-1, c)
    n = x2.shape[0]
    w32 = weight.astype(jnp.float32)
    b32 = bias.astype(jnp.float32)

    # Lane-dense packing: G = lcm(C, 128) // C logical rows per kernel row so
    # every tile / store is a multiple of 128 lanes (no vst.msk partial stores).
    groups = 1
    if c % 128 != 0:
        g = math.lcm(c, 128) // c
        if g > 1 and g * c <= _PACK_MAX_LANES and n % g == 0:
            groups = g

    if groups > 1:
        lanes = groups * c
        xp = x2.reshape(n // groups, lanes)         # free row-major reshape
        wp = jnp.tile(w32, (groups,)).reshape(1, lanes)
        bp = jnp.tile(b32, (groups,)).reshape(1, lanes)
        lane = jnp.arange(lanes, dtype=jnp.int32)
        seg = jnp.arange(groups, dtype=jnp.int32)
        ind = (lane[:, None] // c == seg[None, :]).astype(jnp.float32)  # (L, G)
        red = ind * jnp.float32(1.0 / c)             # segment-mean reduction
        expm = ind.T                                 # (G, L) broadcast-back
        kernel = functools.partial(_ln_rows_packed_kernel, eps=eps)
        out = _layernorm_rows(xp, (wp, bp, red, expm), kernel,
                              flops_per_elem=5 + 8 * groups)
        out = out.reshape(n, c)
    else:
        kernel = functools.partial(_ln_rows_kernel, eps=eps)
        out = _layernorm_rows(x2, (w32.reshape(1, c), b32.reshape(1, c)),
                              kernel, flops_per_elem=7)

    return out.reshape(x.shape)


def _layernorm_channels_first(x, weight, bias, eps):
    """x: (B, C, *spatial); normalize over the channel axis, no transposes."""
    b, c = x.shape[0], x.shape[1]
    s = 1
    for d in x.shape[2:]:
        s *= d
    x3 = x.reshape(b, c, s)   # free reshape; channels on sublanes, spatial on lanes
    item = jnp.dtype(x.dtype).itemsize

    tile_budget = min(_physical_vmem_bytes() // 4, 32 << 20)
    ts = _pick_spatial_tile(s, c, b, x.dtype, tile_budget)
    grid = (b, pl.cdiv(s, ts))

    w3 = weight.astype(jnp.float32).reshape(1, c, 1)
    b3 = bias.astype(jnp.float32).reshape(1, c, 1)

    footprint = 4 * c * ts * item + 4 * 2 * c * 4
    cost = pl.CostEstimate(
        flops=int(7 * b * c * s),
        transcendentals=int(b * s),
        bytes_accessed=int(2 * b * c * s * item + 2 * c * 4),
    )

    out = pl.pallas_call(
        functools.partial(_ln_cfirst_kernel, eps=eps),
        out_shape=jax.ShapeDtypeStruct((b, c, s), x.dtype),
        grid_spec=pltpu.PrefetchScalarGridSpec(
            num_scalar_prefetch=0,
            grid=grid,
            in_specs=[
                pl.BlockSpec((1, c, ts), lambda i, j: (i, 0, j)),
                pl.BlockSpec((1, c, 1), lambda i, j: (0, 0, 0)),
                pl.BlockSpec((1, c, 1), lambda i, j: (0, 0, 0)),
            ],
            out_specs=pl.BlockSpec((1, c, ts), lambda i, j: (i, 0, j)),
        ),
        compiler_params=pltpu.CompilerParams(
            dimension_semantics=("parallel", "parallel"),
            vmem_limit_bytes=_vmem_limit_for(footprint),
        ),
        cost_estimate=cost,
    )(x3, w3, b3)

    return out.reshape(x.shape)


# --------------------------------------------------------------------------
# Module
# --------------------------------------------------------------------------

class LayerNorm:
    """JAX/Pallas port of the PyTorch LayerNorm (channels_last / channels_first)."""

    def __init__(self, normalized_shape, eps=1e-6, data_format="channels_last"):
        if data_format not in ("channels_last", "channels_first"):
            raise NotImplementedError
        self.c = int(normalized_shape)
        self.eps = float(eps)
        self.data_format = data_format
        # Matches nn.Parameter(torch.ones / torch.zeros)
        self.weight = jnp.ones((self.c,), dtype=jnp.float32)
        self.bias = jnp.zeros((self.c,), dtype=jnp.float32)

    def __call__(self, x):
        if self.data_format == "channels_last":
            assert x.shape[-1] == self.c
            return _layernorm_channels_last(x, self.weight, self.bias, self.eps)
        else:
            assert x.shape[1] == self.c
            return _layernorm_channels_first(x, self.weight, self.bias, self.eps)


# --------------------------------------------------------------------------
# Pure-JAX references + test
# --------------------------------------------------------------------------

def _ref_channels_last(x, w, b, eps):
    mean = jnp.mean(x, axis=-1, keepdims=True)
    var = jnp.mean((x - mean) ** 2, axis=-1, keepdims=True)
    return (x - mean) / jnp.sqrt(var + eps) * w + b


def _ref_channels_first(x, w, b, eps):
    u = jnp.mean(x, axis=1, keepdims=True)
    s = jnp.mean((x - u) ** 2, axis=1, keepdims=True)
    xn = (x - u) / jnp.sqrt(s + eps)
    return w[None, :, None, None] * xn + b[None, :, None, None]


if __name__ == "__main__":
    key = jax.random.PRNGKey(0)
    k1, k2, k3, k4, k5, k6, k7, k8 = jax.random.split(key, 8)

    EPS = 1e-6

    # Non-trivial affine params to exercise the scale/shift path.
    C = 32
    w = 1.0 + 0.5 * jax.random.normal(k4, (C,), dtype=jnp.float32)
    b = 0.1 * jax.random.normal(k5, (C,), dtype=jnp.float32)

    # 1) channels_last, C=32: packed path (G=4, 128-lane tiles, MXU stats).
    x_last = jax.random.normal(k1, (2, 16, 16, C), dtype=jnp.float32)
    ln_last = LayerNorm(C, eps=EPS, data_format="channels_last")
    ln_last.weight, ln_last.bias = w, b
    y_last = jax.block_until_ready(ln_last(x_last))
    ref_last = _ref_channels_last(x_last, w, b, EPS)
    assert y_last.shape == x_last.shape and y_last.dtype == x_last.dtype
    assert float(jnp.max(jnp.abs(y_last - ref_last))) < 1e-4

    # 2) channels_first: transpose-free kernel (channels on sublanes).
    x_first = jax.random.normal(k2, (2, C, 16, 16), dtype=jnp.float32)
    ln_first = LayerNorm(C, eps=EPS, data_format="channels_first")
    ln_first.weight, ln_first.bias = w, b
    y_first = jax.block_until_ready(ln_first(x_first))
    ref_first = _ref_channels_first(x_first, w, b, EPS)
    assert y_first.shape == x_first.shape and y_first.dtype == x_first.dtype
    assert float(jnp.max(jnp.abs(y_first - ref_first))) < 1e-4

    # 3) channels_last with a ragged row count (70 rows, not divisible by G):
    #    exercises the plain per-row kernel + Pallas edge-block masking.
    x_odd = jax.random.normal(k3, (2, 7, 5, C), dtype=jnp.float32)
    y_odd = jax.block_until_ready(ln_last(x_odd))
    ref_odd = _ref_channels_last(x_odd, w, b, EPS)
    assert y_odd.shape == x_odd.shape and y_odd.dtype == x_odd.dtype
    assert float(jnp.max(jnp.abs(y_odd - ref_odd))) < 1e-4

    # 4) channels_last, C=48 (does not divide 128): generalized packing
    #    G = lcm(48,128)//48 = 8 -> 384-lane tiles, MXU segment stats.
    C2 = 48
    w2 = 1.0 + 0.5 * jax.random.normal(k6, (C2,), dtype=jnp.float32)
    b2 = 0.1 * jax.random.normal(k7, (C2,), dtype=jnp.float32)
    x_48 = jax.random.normal(k8, (2, 8, 8, C2), dtype=jnp.float32)
    ln_48 = LayerNorm(C2, eps=EPS, data_format="channels_last")
    ln_48.weight, ln_48.bias = w2, b2
    y_48 = jax.block_until_ready(ln_48(x_48))
    ref_48 = _ref_channels_last(x_48, w2, b2, EPS)
    assert y_48.shape == x_48.shape and y_48.dtype == x_48.dtype
    assert float(jnp.max(jnp.abs(y_48 - ref_48))) < 1e-4

    print("KERNEL_OK")
</pallas_src>

<mosaic_0001>
module attributes {stable_mosaic.version = 11 : i64} {
  func.func @_ln_rows_packed_kernel(%arg0: i32, %arg1: memref<128x128xf32, #tpu.memory_space<vmem>>, %arg2: memref<1x128xf32, #tpu.memory_space<vmem>>, %arg3: memref<1x128xf32, #tpu.memory_space<vmem>>, %arg4: memref<128x4xf32, #tpu.memory_space<vmem>>, %arg5: memref<4x128xf32, #tpu.memory_space<vmem>>, %arg6: memref<128x128xf32, #tpu.memory_space<vmem>>) attributes {dimension_semantics = [#tpu.dimension_semantics<parallel>], iteration_bounds = array<i64: 1>, scalar_prefetch = 0 : i64, scratch_operands = 0 : i64, tpu.core_type = #tpu.core_type<tc>, window_params = [{transform_indices = @transform_0, window_bounds = array<i64: 128, 128>}, {pipeline_mode = #tpu.pipeline_mode<synchronous>, transform_indices = @transform_1, window_bounds = array<i64: 1, 128>}, {pipeline_mode = #tpu.pipeline_mode<synchronous>, transform_indices = @transform_2, window_bounds = array<i64: 1, 128>}, {pipeline_mode = #tpu.pipeline_mode<synchronous>, transform_indices = @transform_3, window_bounds = array<i64: 128, 4>}, {pipeline_mode = #tpu.pipeline_mode<synchronous>, transform_indices = @transform_4, window_bounds = array<i64: 4, 128>}, {transform_indices = @transform_5, window_bounds = array<i64: 128, 128>}]} {
    %c0 = arith.constant 0 : index
    %c0_0 = arith.constant 0 : index
    %0 = vector.load %arg1[%c0, %c0_0] : memref<128x128xf32, #tpu.memory_space<vmem>>, vector<128x128xf32>
    %c0_1 = arith.constant 0 : index
    %c0_2 = arith.constant 0 : index
    %1 = vector.load %arg4[%c0_1, %c0_2] : memref<128x4xf32, #tpu.memory_space<vmem>>, vector<128x4xf32>
    %c0_3 = arith.constant 0 : index
    %c0_4 = arith.constant 0 : index
    %2 = vector.load %arg5[%c0_3, %c0_4] : memref<4x128xf32, #tpu.memory_space<vmem>>, vector<4x128xf32>
    %cst = arith.constant dense<0.000000e+00> : vector<128x4xf32>
    %3 = tpu.matmul %0, %1, %cst {dimension_numbers = #tpu.dot_dimension_numbers<[1], [0], [0], [1], [0, 0, 1, 1], [], []>} : vector<128x128xf32>, vector<128x4xf32>, vector<128x4xf32> -> vector<128x4xf32>
    %cst_5 = arith.constant dense<0.000000e+00> : vector<128x128xf32>
    %4 = tpu.matmul %3, %2, %cst_5 {dimension_numbers = #tpu.dot_dimension_numbers<[1], [0], [0], [1], [0, 0, 1, 1], [], []>} : vector<128x4xf32>, vector<4x128xf32>, vector<128x128xf32> -> vector<128x128xf32>
    %5 = arith.subf %0, %4 : vector<128x128xf32>
    %6 = arith.mulf %5, %5 : vector<128x128xf32>
    %cst_6 = arith.constant dense<0.000000e+00> : vector<128x4xf32>
    %7 = tpu.matmul %6, %1, %cst_6 {dimension_numbers = #tpu.dot_dimension_numbers<[1], [0], [0], [1], [0, 0, 1, 1], [], []>} : vector<128x128xf32>, vector<128x4xf32>, vector<128x4xf32> -> vector<128x4xf32>
    %cst_7 = arith.constant 9.99999997E-7 : f32
    %8 = vector.broadcast %cst_7 : f32 to vector<128x4xf32>
    %9 = arith.addf %7, %8 : vector<128x4xf32>
    %10 = math.rsqrt %9 : vector<128x4xf32>
    %cst_8 = arith.constant dense<0.000000e+00> : vector<128x128xf32>
    %11 = tpu.matmul %10, %2, %cst_8 {dimension_numbers = #tpu.dot_dimension_numbers<[1], [0], [0], [1], [0, 0, 1, 1], [], []>} : vector<128x4xf32>, vector<4x128xf32>, vector<128x128xf32> -> vector<128x128xf32>
    %12 = arith.mulf %5, %11 : vector<128x128xf32>
    %c0_9 = arith.constant 0 : index
    %c0_10 = arith.constant 0 : index
    %13 = vector.load %arg2[%c0_9, %c0_10] : memref<1x128xf32, #tpu.memory_space<vmem>>, vector<1x128xf32>
    %14 = vector.broadcast %13 : vector<1x128xf32> to vector<128x128xf32>
    %15 = arith.mulf %12, %14 : vector<128x128xf32>
    %c0_11 = arith.constant 0 : index
    %c0_12 = arith.constant 0 : index
    %16 = vector.load %arg3[%c0_11, %c0_12] : memref<1x128xf32, #tpu.memory_space<vmem>>, vector<1x128xf32>
    %17 = vector.broadcast %16 : vector<1x128xf32> to vector<128x128xf32>
    %18 = arith.addf %15, %17 : vector<128x128xf32>
    %c0_13 = arith.constant 0 : index
    %c0_14 = arith.constant 0 : index
    %19 = vector.load %arg6[%c0_13, %c0_14] : memref<128x128xf32, #tpu.memory_space<vmem>>, vector<128x128xf32>
    tpu.vector_store %arg6[%c0_13, %c0_14], %18 {strides = array<i32>} : memref<128x128xf32, #tpu.memory_space<vmem>>, vector<128x128xf32>,
    return
  }
  func.func @transform_0(%arg0: i32) -> (i32, i32) {
    %c0_i32 = arith.constant 0 : i32
    %c0_i32_0 = arith.constant 0 : i32
    return %arg0, %c0_i32 : i32, i32
  }
  func.func @transform_1(%arg0: i32) -> (i32, i32) {
    %c0_i32 = arith.constant 0 : i32
    %c0_i32_0 = arith.constant 0 : i32
    %c0_i32_1 = arith.constant 0 : i32
    return %c0_i32, %c0_i32_0 : i32, i32
  }
  func.func @transform_2(%arg0: i32) -> (i32, i32) {
    %c0_i32 = arith.constant 0 : i32
    %c0_i32_0 = arith.constant 0 : i32
    %c0_i32_1 = arith.constant 0 : i32
    return %c0_i32, %c0_i32_0 : i32, i32
  }
  func.func @transform_3(%arg0: i32) -> (i32, i32) {
    %c0_i32 = arith.constant 0 : i32
    %c0_i32_0 = arith.constant 0 : i32
    %c0_i32_1 = arith.constant 0 : i32
    return %c0_i32, %c0_i32_0 : i32, i32
  }
  func.func @transform_4(%arg0: i32) -> (i32, i32) {
    %c0_i32 = arith.constant 0 : i32
    %c0_i32_0 = arith.constant 0 : i32
    %c0_i32_1 = arith.constant 0 : i32
    return %c0_i32, %c0_i32_0 : i32, i32
  }
  func.func @transform_5(%arg0: i32) -> (i32, i32) {
    %c0_i32 = arith.constant 0 : i32
    %c0_i32_0 = arith.constant 0 : i32
    return %arg0, %c0_i32 : i32, i32
  }
}

</mosaic_0001>

<llo_original>
// kernel: tpu_custom_call.1
$region0: #{tpu_custom_call.1}
  #allocation0 [shape = 'u32[]', space=smem, size = 0x4, offset = 0x4, fixed_abs, tag = 'smem constant byte address 0x4 - core index']
  #allocation1 [shape = 'u32[72,128]{1,0:T(1,128)}', space=vmem, size = 0x9000, scoped, tag = 'internal scratch']
  %s0 = inlined_call_operand.vmem [shape: f32[128,128], index: 0, kind: input, shape index: {}]
  %s1 = inlined_call_operand.hbm [shape: f32[1,128], index: 1, kind: input, shape index: {}]
  %s2 = inlined_call_operand.vmem [shape: f32[1,128], index: 2, kind: input, shape index: {}]
  %s3 = inlined_call_operand.vmem [shape: f32[128,4], index: 3, kind: input, shape index: {}]
  %s4 = inlined_call_operand.vmem [shape: f32[4,128], index: 4, kind: input, shape index: {}]
  %s5 = inlined_call_operand.hbm [shape: f32[128,128], index: 5, kind: output, shape index: {}]
  %s6 = sld [smem:[#allocation0]]
  $region34: #{tpu_custom_call.1} parent=0
    _
  %s8 = ssub.s32 1, %s6
  %s9 = scalar_select 0, %s8, %s6
  $region1: #{tpu_custom_call.1} parent=0
    #allocation2 [shape = 'u8[512]{0}', space=vmem, size = 0x400, scoped, tag = 'input window, operand 1, single buffered']
    #allocation3 [shape = 's32[1]{0}', space=sflag, size = 0x4, scoped, tag = 'scoped memory for tpu_custom_call.1']
    #allocation4 [shape = 's32[1]{0}', space=sflag, size = 0x4, scoped, tag = 'scoped memory for tpu_custom_call.1']
    #allocation5 [shape = 'u8[65536]{0}', space=vmem, size = 0x10000, scoped, tag = 'output window, operand 0, single buffered']
    %10 = vsyncpa [#allocation3], 0
    %11 = vsyncpa [#allocation4], 0
    // Predicated region
    $region2: #{tpu_custom_call.1} parent=1 // pred_check
      _
    $region3: #{tpu_custom_call.1} parent=1 // pred_check_branch
      %13 = sbr.rel (0) target = $region5
    $region4: #{tpu_custom_call.1} parent=1 // pred_region
      _
    $region5: #{tpu_custom_call.1} parent=1 // pred_fallthru
      _
    // Predicated region
    $region6: #{tpu_custom_call.1} parent=1 // pred_check
      _
    $region7: #{tpu_custom_call.1} parent=1 // pred_check_branch
      %15 = sbr.rel (0) target = $region9
    $region8: #{tpu_custom_call.1} parent=1 // pred_region
      %17 = vsyncadd [#allocation3], 0
      %s19 = sshll.u32 %s1, 4
      %s20 = int_to_ptr.hbm [resolvable:$true] %s19
      %s21 = sshll.u32 [#allocation2], 4
      %s22 = int_to_ptr.vmem [resolvable:$true] %s21
      %24 = dma.hbm_to_vmem [thread:$0]  %s20, 16, %s22, [#allocation3]
    $region9: #{tpu_custom_call.1} parent=1 // pred_fallthru
      _
    // Predicated region
    $region10: #{tpu_custom_call.1} parent=1 // pred_check
      _
    $region11: #{tpu_custom_call.1} parent=1 // pred_check_branch
      %26 = sbr.rel (0) target = $region13
    $region12: #{tpu_custom_call.1} parent=1 // pred_region
      _
    $region13: #{tpu_custom_call.1} parent=1 // pred_fallthru
      _
    // Predicated region
    $region14: #{tpu_custom_call.1} parent=1 // pred_check
      _
    $region15: #{tpu_custom_call.1} parent=1 // pred_check_branch
      %28 = sbr.rel (0) target = $region17
    $region16: #{tpu_custom_call.1} parent=1 // pred_region
      _
    $region17: #{tpu_custom_call.1} parent=1 // pred_fallthru
      _
    // Predicated region
    $region18: #{tpu_custom_call.1} parent=1 // pred_check
      _
    $region19: #{tpu_custom_call.1} parent=1 // pred_check_branch
      %30 = sbr.rel (0) target = $region21
    $region20: #{tpu_custom_call.1} parent=1 // pred_region
      _
    $region21: #{tpu_custom_call.1} parent=1 // pred_fallthru
      _
    // Predicated region
    $region22: #{tpu_custom_call.1} parent=1 // pred_check
      _
    $region23: #{tpu_custom_call.1} parent=1 // pred_check_branch
      %32 = sbr.rel (0) target = $region25
    $region24: #{tpu_custom_call.1} parent=1 // pred_region
      %34 = dma.done [#allocation3], 16
    $region25: #{tpu_custom_call.1} parent=1 // pred_fallthru
      _
    %v35 = vld [vmem:[%s0] sm:$0xff]
    %v36 = vld [vmem:[%s0 + $0x8] sm:$0xff]
    %v37 = vld [vmem:[%s0 + $0x10] sm:$0xff]
    %v38 = vld [vmem:[%s0 + $0x18] sm:$0xff]
    %v39 = vld [vmem:[%s0 + $0x20] sm:$0xff]
    %v40 = vld [vmem:[%s0 + $0x28] sm:$0xff]
    %v41 = vld [vmem:[%s0 + $0x30] sm:$0xff]
    %v42 = vld [vmem:[%s0 + $0x38] sm:$0xff]
    %v43 = vld [vmem:[%s0 + $0x40] sm:$0xff]
    %v44 = vld [vmem:[%s0 + $0x48] sm:$0xff]
    %v45 = vld [vmem:[%s0 + $0x50] sm:$0xff]
    %v46 = vld [vmem:[%s0 + $0x58] sm:$0xff]
    %v47 = vld [vmem:[%s0 + $0x60] sm:$0xff]
    %v48 = vld [vmem:[%s0 + $0x68] sm:$0xff]
    %v49 = vld [vmem:[%s0 + $0x70] sm:$0xff]
    %v50 = vld [vmem:[%s0 + $0x78] sm:$0xff]
    %v51 = vld [vmem:[%s3] sm:$0xff]
    %v52 = vld [vmem:[%s3 + $0x8] sm:$0xff]
    %v53 = vld [vmem:[%s3 + $0x10] sm:$0xff]
    %v54 = vld [vmem:[%s3 + $0x18] sm:$0xff]
    %v55 = vld [vmem:[%s3 + $0x20] sm:$0xff]
    %v56 = vld [vmem:[%s3 + $0x28] sm:$0xff]
    %v57 = vld [vmem:[%s3 + $0x30] sm:$0xff]
    %v58 = vld [vmem:[%s3 + $0x38] sm:$0xff]
    %v59 = vld [vmem:[%s3 + $0x40] sm:$0xff]
    %v60 = vld [vmem:[%s3 + $0x48] sm:$0xff]
    %v61 = vld [vmem:[%s3 + $0x50] sm:$0xff]
    %v62 = vld [vmem:[%s3 + $0x58] sm:$0xff]
    %v63 = vld [vmem:[%s3 + $0x60] sm:$0xff]
    %v64 = vld [vmem:[%s3 + $0x68] sm:$0xff]
    %v65 = vld [vmem:[%s3 + $0x70] sm:$0xff]
    %v66 = vld [vmem:[%s3 + $0x78] sm:$0xff]
    %v67 = vld [vmem:[%s4] sm:$0xf]
    %68 = vmatpush.msra.mxu0 %v66
    %69 = vmatpush.msra.mxu0 %v65
    %70 = vmatpush.msra.mxu0 %v64
    %71 = vmatpush.msra.mxu0 %v63
    %72 = vmatpush.msra.mxu0 %v62
    %73 = vmatpush.msra.mxu0 %v61
    %74 = vmatpush.msra.mxu0 %v60
    %75 = vmatpush.msra.mxu0 %v59
    %76 = vmatpush.msra.mxu0 %v58
    %77 = vmatpush.msra.mxu0 %v57
    %78 = vmatpush.msra.mxu0 %v56
    %79 = vmatpush.msra.mxu0 %v55
    %80 = vmatpush.msra.mxu0 %v54
    %81 = vmatpush.msra.mxu0 %v53
    %82 = vmatpush.msra.mxu0 %v52
    %83 = vmatpush.msra.mxu0 %v51
    %84 = vmatmul.f32.gmra.mxu0 %v35
    %v85 = vpop.f32.mrf.mxu0
    %v86 = vadd.f32 0.0, %v85
    %87 = vmatmul.f32.gmra.mxu0 %v36
    %v88 = vpop.f32.mrf.mxu0
    %v89 = vadd.f32 0.0, %v88
    %90 = vmatmul.f32.gmra.mxu0 %v37
    %v91 = vpop.f32.mrf.mxu0
    %v92 = vadd.f32 0.0, %v91
    %93 = vmatmul.f32.gmra.mxu0 %v38
    %v94 = vpop.f32.mrf.mxu0
    %v95 = vadd.f32 0.0, %v94
    %96 = vmatmul.f32.gmra.mxu0 %v39
    %v97 = vpop.f32.mrf.mxu0
    %v98 = vadd.f32 0.0, %v97
    %99 = vmatmul.f32.gmra.mxu0 %v40
    %v100 = vpop.f32.mrf.mxu0
    %v101 = vadd.f32 0.0, %v100
    %102 = vmatmul.f32.gmra.mxu0 %v41
    %v103 = vpop.f32.mrf.mxu0
    %v104 = vadd.f32 0.0, %v103
    %105 = vmatmul.f32.gmra.mxu0 %v42
    %v106 = vpop.f32.mrf.mxu0
    %v107 = vadd.f32 0.0, %v106
    %108 = vmatmul.f32.gmra.mxu0 %v43
    %v109 = vpop.f32.mrf.mxu0
    %v110 = vadd.f32 0.0, %v109
    %111 = vmatmul.f32.gmra.mxu0 %v44
    %v112 = vpop.f32.mrf.mxu0
    %v113 = vadd.f32 0.0, %v112
    %114 = vmatmul.f32.gmra.mxu0 %v45
    %v115 = vpop.f32.mrf.mxu0
    %v116 = vadd.f32 0.0, %v115
    %117 = vmatmul.f32.gmra.mxu0 %v46
    %v118 = vpop.f32.mrf.mxu0
    %v119 = vadd.f32 0.0, %v118
    %120 = vmatmul.f32.gmra.mxu0 %v47
    %v121 = vpop.f32.mrf.mxu0
    %v122 = vadd.f32 0.0, %v121
    %123 = vmatmul.f32.gmra.mxu0 %v48
    %v124 = vpop.f32.mrf.mxu0
    %v125 = vadd.f32 0.0, %v124
    %126 = vmatmul.f32.gmra.mxu0 %v49
    %v127 = vpop.f32.mrf.mxu0
    %v128 = vadd.f32 0.0, %v127
    %129 = vmatmul.f32.gmra.mxu0 %v50
    %v130 = vpop.f32.mrf.mxu0
    %v131 = vadd.f32 0.0, %v130
    %132 = vdwg.mxu0
    %vm133 = vcmask 31744
    %v135 = vsel %vm133, %v86, 0
    %v138 = vsel %vm133, %v89, 0
    %v141 = vsel %vm133, %v92, 0
    %v144 = vsel %vm133, %v95, 0
    %v147 = vsel %vm133, %v98, 0
    %v150 = vsel %vm133, %v101, 0
    %v153 = vsel %vm133, %v104, 0
    %v156 = vsel %vm133, %v107, 0
    %v159 = vsel %vm133, %v110, 0
    %v162 = vsel %vm133, %v113, 0
    %v165 = vsel %vm133, %v116, 0
    %v168 = vsel %vm133, %v119, 0
    %v171 = vsel %vm133, %v122, 0
    %v174 = vsel %vm133, %v125, 0
    %v177 = vsel %vm133, %v128, 0
    %v180 = vsel %vm133, %v131, 0
    %vm182 = vcmask 1043456
    %v184 = vsel %vm182, %v67, 0
    %186 = vmatpush.msra.mxu0 0.0
    %187 = vmatpush.msra.mxu0 0.0
    %188 = vmatpush.msra.mxu0 0.0
    %189 = vmatpush.msra.mxu0 0.0
    %190 = vmatpush.msra.mxu0 0.0
    %191 = vmatpush.msra.mxu0 0.0
    %192 = vmatpush.msra.mxu0 0.0
    %193 = vmatpush.msra.mxu0 0.0
    %194 = vmatpush.msra.mxu0 0.0
    %195 = vmatpush.msra.mxu0 0.0
    %196 = vmatpush.msra.mxu0 0.0
    %197 = vmatpush.msra.mxu0 0.0
    %198 = vmatpush.msra.mxu0 0.0
    %199 = vmatpush.msra.mxu0 0.0
    %200 = vmatpush.msra.mxu0 0.0
    %201 = vmatpush.msra.mxu0 %v184
    %202 = vmatmul.f32.gmra.mxu0 %v135
    %v203 = vpop.f32.mrf.mxu0
    %v204 = vadd.f32 0.0, %v203
    %205 = vmatmul.f32.gmra.mxu0 %v138
    %v206 = vpop.f32.mrf.mxu0
    %v207 = vadd.f32 0.0, %v206
    %208 = vmatmul.f32.gmra.mxu0 %v141
    %v209 = vpop.f32.mrf.mxu0
    %v210 = vadd.f32 0.0, %v209
    %211 = vmatmul.f32.gmra.mxu0 %v144
    %v212 = vpop.f32.mrf.mxu0
    %v213 = vadd.f32 0.0, %v212
    %214 = vmatmul.f32.gmra.mxu0 %v147
    %v215 = vpop.f32.mrf.mxu0
    %v216 = vadd.f32 0.0, %v215
    %217 = vmatmul.f32.gmra.mxu0 %v150
    %v218 = vpop.f32.mrf.mxu0
    %v219 = vadd.f32 0.0, %v218
    %220 = vmatmul.f32.gmra.mxu0 %v153
    %v221 = vpop.f32.mrf.mxu0
    %v222 = vadd.f32 0.0, %v221
    %223 = vmatmul.f32.gmra.mxu0 %v156
    %v224 = vpop.f32.mrf.mxu0
    %v225 = vadd.f32 0.0, %v224
    %226 = vmatmul.f32.gmra.mxu0 %v159
    %v227 = vpop.f32.mrf.mxu0
    %v228 = vadd.f32 0.0, %v227
    %229 = vmatmul.f32.gmra.mxu0 %v162
    %v230 = vpop.f32.mrf.mxu0
    %v231 = vadd.f32 0.0, %v230
    %232 = vmatmul.f32.gmra.mxu0 %v165
    %v233 = vpop.f32.mrf.mxu0
    %v234 = vadd.f32 0.0, %v233
    %235 = vmatmul.f32.gmra.mxu0 %v168
    %v236 = vpop.f32.mrf.mxu0
    %v237 = vadd.f32 0.0, %v236
    %238 = vmatmul.f32.gmra.mxu0 %v171
    %v239 = vpop.f32.mrf.mxu0
    %v240 = vadd.f32 0.0, %v239
    %241 = vmatmul.f32.gmra.mxu0 %v174
    %v242 = vpop.f32.mrf.mxu0
    %v243 = vadd.f32 0.0, %v242
    %244 = vmatmul.f32.gmra.mxu0 %v177
    %v245 = vpop.f32.mrf.mxu0
    %v246 = vadd.f32 0.0, %v245
    %247 = vmatmul.f32.gmra.mxu0 %v180
    %v248 = vpop.f32.mrf.mxu0
    %v249 = vadd.f32 0.0, %v248
    %250 = vdwg.mxu0
    %v251 = vsub.f32 %v35, %v204
    %v252 = vsub.f32 %v36, %v207
    %v253 = vsub.f32 %v37, %v210
    %v254 = vsub.f32 %v38, %v213
    %v255 = vsub.f32 %v39, %v216
    %v256 = vsub.f32 %v40, %v219
    %v257 = vsub.f32 %v41, %v222
    %v258 = vsub.f32 %v42, %v225
    %v259 = vsub.f32 %v43, %v228
    %v260 = vsub.f32 %v44, %v231
    %v261 = vsub.f32 %v45, %v234
    %v262 = vsub.f32 %v46, %v237
    %v263 = vsub.f32 %v47, %v240
    %v264 = vsub.f32 %v48, %v243
    %v265 = vsub.f32 %v49, %v246
    %v266 = vsub.f32 %v50, %v249
    %v267 = vmul.f32 %v251, %v251
    %v268 = vmul.f32 %v252, %v252
    %v269 = vmul.f32 %v253, %v253
    %v270 = vmul.f32 %v254, %v254
    %v271 = vmul.f32 %v255, %v255
    %v272 = vmul.f32 %v256, %v256
    %v273 = vmul.f32 %v257, %v257
    %v274 = vmul.f32 %v258, %v258
    %v275 = vmul.f32 %v259, %v259
    %v276 = vmul.f32 %v260, %v260
    %v277 = vmul.f32 %v261, %v261
    %v278 = vmul.f32 %v262, %v262
    %v279 = vmul.f32 %v263, %v263
    %v280 = vmul.f32 %v264, %v264
    %v281 = vmul.f32 %v265, %v265
    %v282 = vmul.f32 %v266, %v266
    %283 = vmatpush.msra.mxu0 %v66
    %284 = vmatpush.msra.mxu0 %v65
    %285 = vmatpush.msra.mxu0 %v64
    %286 = vmatpush.msra.mxu0 %v63
    %287 = vmatpush.msra.mxu0 %v62
    %288 = vmatpush.msra.mxu0 %v61
    %289 = vmatpush.msra.mxu0 %v60
    %290 = vmatpush.msra.mxu0 %v59
    %291 = vmatpush.msra.mxu0 %v58
    %292 = vmatpush.msra.mxu0 %v57
    %293 = vmatpush.msra.mxu0 %v56
    %294 = vmatpush.msra.mxu0 %v55
    %295 = vmatpush.msra.mxu0 %v54
    %296 = vmatpush.msra.mxu0 %v53
    %297 = vmatpush.msra.mxu0 %v52
    %298 = vmatpush.msra.mxu0 %v51
    %299 = vmatmul.f32.gmra.mxu0 %v267
    %v300 = vpop.f32.mrf.mxu0
    %v301 = vadd.f32 1e-06, %v300
    %302 = vmatmul.f32.gmra.mxu0 %v268
    %v303 = vpop.f32.mrf.mxu0
    %v304 = vadd.f32 1e-06, %v303
    %305 = vmatmul.f32.gmra.mxu0 %v269
    %v306 = vpop.f32.mrf.mxu0
    %v307 = vadd.f32 1e-06, %v306
    %308 = vmatmul.f32.gmra.mxu0 %v270
    %v309 = vpop.f32.mrf.mxu0
    %v310 = vadd.f32 1e-06, %v309
    %311 = vmatmul.f32.gmra.mxu0 %v271
    %v312 = vpop.f32.mrf.mxu0
    %v313 = vadd.f32 1e-06, %v312
    %314 = vmatmul.f32.gmra.mxu0 %v272
    %v315 = vpop.f32.mrf.mxu0
    %v316 = vadd.f32 1e-06, %v315
    %317 = vmatmul.f32.gmra.mxu0 %v273
    %v318 = vpop.f32.mrf.mxu0
    %v319 = vadd.f32 1e-06, %v318
    %320 = vmatmul.f32.gmra.mxu0 %v274
    %v321 = vpop.f32.mrf.mxu0
    %v322 = vadd.f32 1e-06, %v321
    %323 = vmatmul.f32.gmra.mxu0 %v275
    %v324 = vpop.f32.mrf.mxu0
    %v325 = vadd.f32 1e-06, %v324
    %326 = vmatmul.f32.gmra.mxu0 %v276
    %v327 = vpop.f32.mrf.mxu0
    %v328 = vadd.f32 1e-06, %v327
    %329 = vmatmul.f32.gmra.mxu0 %v277
    %v330 = vpop.f32.mrf.mxu0
    %v331 = vadd.f32 1e-06, %v330
    %332 = vmatmul.f32.gmra.mxu0 %v278
    %v333 = vpop.f32.mrf.mxu0
    %v334 = vadd.f32 1e-06, %v333
    %335 = vmatmul.f32.gmra.mxu0 %v279
    %v336 = vpop.f32.mrf.mxu0
    %v337 = vadd.f32 1e-06, %v336
    %338 = vmatmul.f32.gmra.mxu0 %v280
    %v339 = vpop.f32.mrf.mxu0
    %v340 = vadd.f32 1e-06, %v339
    %341 = vmatmul.f32.gmra.mxu0 %v281
    %v342 = vpop.f32.mrf.mxu0
    %v343 = vadd.f32 1e-06, %v342
    %344 = vmatmul.f32.gmra.mxu0 %v282
    %v345 = vpop.f32.mrf.mxu0
    %v346 = vadd.f32 1e-06, %v345
    %347 = vdwg.mxu0
    %v348 = vrsqrt.pop %v301
    %v349 = vmul.f32 %v348, %v301
    %v350 = vmul.f32 %v349, %v348
    %v351 = vmul.f32 0.5, %v350
    %v352 = vsub.f32 1.5, %v351
    %v353 = vmul.f32 %v348, %v352
    %vm354 = vweird.f32 %v301
    %vm355 = vweird.f32 %v348
    %vm356 = vmor %vm354, %vm355
    %v357 = vsel %vm356, %v348, %v353
    %v358 = vrsqrt.pop %v304
    %v359 = vmul.f32 %v358, %v304
    %v360 = vmul.f32 %v359, %v358
    %v361 = vmul.f32 0.5, %v360
    %v362 = vsub.f32 1.5, %v361
    %v363 = vmul.f32 %v358, %v362
    %vm364 = vweird.f32 %v304
    %vm365 = vweird.f32 %v358
    %vm366 = vmor %vm364, %vm365
    %v367 = vsel %vm366, %v358, %v363
    %v368 = vrsqrt.pop %v307
    %v369 = vmul.f32 %v368, %v307
    %v370 = vmul.f32 %v369, %v368
    %v371 = vmul.f32 0.5, %v370
    %v372 = vsub.f32 1.5, %v371
    %v373 = vmul.f32 %v368, %v372
    %vm374 = vweird.f32 %v307
    %vm375 = vweird.f32 %v368
    %vm376 = vmor %vm374, %vm375
    %v377 = vsel %vm376, %v368, %v373
    %v378 = vrsqrt.pop %v310
    %v379 = vmul.f32 %v378, %v310
    %v380 = vmul.f32 %v379, %v378
    %v381 = vmul.f32 0.5, %v380
    %v382 = vsub.f32 1.5, %v381
    %v383 = vmul.f32 %v378, %v382
    %vm384 = vweird.f32 %v310
    %vm385 = vweird.f32 %v378
    %vm386 = vmor %vm384, %vm385
    %v387 = vsel %vm386, %v378, %v383
    %v388 = vrsqrt.pop %v313
    %v389 = vmul.f32 %v388, %v313
    %v390 = vmul.f32 %v389, %v388
    %v391 = vmul.f32 0.5, %v390
    %v392 = vsub.f32 1.5, %v391
    %v393 = vmul.f32 %v388, %v392
    %vm394 = vweird.f32 %v313
    %vm395 = vweird.f32 %v388
    %vm396 = vmor %vm394, %vm395
    %v397 = vsel %vm396, %v388, %v393
    %v398 = vrsqrt.pop %v316
    %v399 = vmul.f32 %v398, %v316
    %v400 = vmul.f32 %v399, %v398
    %v401 = vmul.f32 0.5, %v400
    %v402 = vsub.f32 1.5, %v401
    %v403 = vmul.f32 %v398, %v402
    %vm404 = vweird.f32 %v316
    %vm405 = vweird.f32 %v398
    %vm406 = vmor %vm404, %vm405
    %v407 = vsel %vm406, %v398, %v403
    %v408 = vrsqrt.pop %v319
    %v409 = vmul.f32 %v408, %v319
    %v410 = vmul.f32 %v409, %v408
    %v411 = vmul.f32 0.5, %v410
    %v412 = vsub.f32 1.5, %v411
    %v413 = vmul.f32 %v408, %v412
    %vm414 = vweird.f32 %v319
    %vm415 = vweird.f32 %v408
    %vm416 = vmor %vm414, %vm415
    %v417 = vsel %vm416, %v408, %v413
    %v418 = vrsqrt.pop %v322
    %v419 = vmul.f32 %v418, %v322
    %v420 = vmul.f32 %v419, %v418
    %v421 = vmul.f32 0.5, %v420
    %v422 = vsub.f32 1.5, %v421
    %v423 = vmul.f32 %v418, %v422
    %vm424 = vweird.f32 %v322
    %vm425 = vweird.f32 %v418
    %vm426 = vmor %vm424, %vm425
    %v427 = vsel %vm426, %v418, %v423
    %v428 = vrsqrt.pop %v325
    %v429 = vmul.f32 %v428, %v325
    %v430 = vmul.f32 %v429, %v428
    %v431 = vmul.f32 0.5, %v430
    %v432 = vsub.f32 1.5, %v431
    %v433 = vmul.f32 %v428, %v432
    %vm434 = vweird.f32 %v325
    %vm435 = vweird.f32 %v428
    %vm436 = vmor %vm434, %vm435
    %v437 = vsel %vm436, %v428, %v433
    %v438 = vrsqrt.pop %v328
    %v439 = vmul.f32 %v438, %v328
    %v440 = vmul.f32 %v439, %v438
    %v441 = vmul.f32 0.5, %v440
    %v442 = vsub.f32 1.5, %v441
    %v443 = vmul.f32 %v438, %v442
    %vm444 = vweird.f32 %v328
    %vm445 = vweird.f32 %v438
    %vm446 = vmor %vm444, %vm445
    %v447 = vsel %vm446, %v438, %v443
    %v448 = vrsqrt.pop %v331
    %v449 = vmul.f32 %v448, %v331
    %v450 = vmul.f32 %v449, %v448
    %v451 = vmul.f32 0.5, %v450
    %v452 = vsub.f32 1.5, %v451
    %v453 = vmul.f32 %v448, %v452
    %vm454 = vweird.f32 %v331
    %vm455 = vweird.f32 %v448
    %vm456 = vmor %vm454, %vm455
    %v457 = vsel %vm456, %v448, %v453
    %v458 = vrsqrt.pop %v334
    %v459 = vmul.f32 %v458, %v334
    %v460 = vmul.f32 %v459, %v458
    %v461 = vmul.f32 0.5, %v460
    %v462 = vsub.f32 1.5, %v461
    %v463 = vmul.f32 %v458, %v462
    %vm464 = vweird.f32 %v334
    %vm465 = vweird.f32 %v458
    %vm466 = vmor %vm464, %vm465
    %v467 = vsel %vm466, %v458, %v463
    %v468 = vrsqrt.pop %v337
    %v469 = vmul.f32 %v468, %v337
    %v470 = vmul.f32 %v469, %v468
    %v471 = vmul.f32 0.5, %v470
    %v472 = vsub.f32 1.5, %v471
    %v473 = vmul.f32 %v468, %v472
    %vm474 = vweird.f32 %v337
    %vm475 = vweird.f32 %v468
    %vm476 = vmor %vm474, %vm475
    %v477 = vsel %vm476, %v468, %v473
    %v478 = vrsqrt.pop %v340
    %v479 = vmul.f32 %v478, %v340
    %v480 = vmul.f32 %v479, %v478
    %v481 = vmul.f32 0.5, %v480
    %v482 = vsub.f32 1.5, %v481
    %v483 = vmul.f32 %v478, %v482
    %vm484 = vweird.f32 %v340
    %vm485 = vweird.f32 %v478
    %vm486 = vmor %vm484, %vm485
    %v487 = vsel %vm486, %v478, %v483
    %v488 = vrsqrt.pop %v343
    %v489 = vmul.f32 %v488, %v343
    %v490 = vmul.f32 %v489, %v488
    %v491 = vmul.f32 0.5, %v490
    %v492 = vsub.f32 1.5, %v491
    %v493 = vmul.f32 %v488, %v492
    %vm494 = vweird.f32 %v343
    %vm495 = vweird.f32 %v488
    %vm496 = vmor %vm494, %vm495
    %v497 = vsel %vm496, %v488, %v493
    %v498 = vrsqrt.pop %v346
    %v499 = vmul.f32 %v498, %v346
    %v500 = vmul.f32 %v499, %v498
    %v501 = vmul.f32 0.5, %v500
    %v502 = vsub.f32 1.5, %v501
    %v503 = vmul.f32 %v498, %v502
    %vm504 = vweird.f32 %v346
    %vm505 = vweird.f32 %v498
    %vm506 = vmor %vm504, %vm505
    %v507 = vsel %vm506, %v498, %v503
    %v509 = vsel %vm133, %v357, 0
    %v512 = vsel %vm133, %v367, 0
    %v515 = vsel %vm133, %v377, 0
    %v518 = vsel %vm133, %v387, 0
    %v521 = vsel %vm133, %v397, 0
    %v524 = vsel %vm133, %v407, 0
    %v527 = vsel %vm133, %v417, 0
    %v530 = vsel %vm133, %v427, 0
    %v533 = vsel %vm133, %v437, 0
    %v536 = vsel %vm133, %v447, 0
    %v539 = vsel %vm133, %v457, 0
    %v542 = vsel %vm133, %v467, 0
    %v545 = vsel %vm133, %v477, 0
    %v548 = vsel %vm133, %v487, 0
    %v551 = vsel %vm133, %v497, 0
    %v554 = vsel %vm133, %v507, 0
    %556 = vmatpush.msra.mxu0 0.0
    %557 = vmatpush.msra.mxu0 0.0
    %558 = vmatpush.msra.mxu0 0.0
    %559 = vmatpush.msra.mxu0 0.0
    %560 = vmatpush.msra.mxu0 0.0
    %561 = vmatpush.msra.mxu0 0.0
    %562 = vmatpush.msra.mxu0 0.0
    %563 = vmatpush.msra.mxu0 0.0
    %564 = vmatpush.msra.mxu0 0.0
    %565 = vmatpush.msra.mxu0 0.0
    %566 = vmatpush.msra.mxu0 0.0
    %567 = vmatpush.msra.mxu0 0.0
    %568 = vmatpush.msra.mxu0 0.0
    %569 = vmatpush.msra.mxu0 0.0
    %570 = vmatpush.msra.mxu0 0.0
    %571 = vmatpush.msra.mxu0 %v184
    %572 = vmatmul.f32.gmra.mxu0 %v509
    %v573 = vpop.f32.mrf.mxu0
    %v574 = vadd.f32 0.0, %v573
    %575 = vmatmul.f32.gmra.mxu0 %v512
    %v576 = vpop.f32.mrf.mxu0
    %v577 = vadd.f32 0.0, %v576
    %578 = vmatmul.f32.gmra.mxu0 %v515
    %v579 = vpop.f32.mrf.mxu0
    %v580 = vadd.f32 0.0, %v579
    %581 = vmatmul.f32.gmra.mxu0 %v518
    %v582 = vpop.f32.mrf.mxu0
    %v583 = vadd.f32 0.0, %v582
    %584 = vmatmul.f32.gmra.mxu0 %v521
    %v585 = vpop.f32.mrf.mxu0
    %v586 = vadd.f32 0.0, %v585
    %587 = vmatmul.f32.gmra.mxu0 %v524
    %v588 = vpop.f32.mrf.mxu0
    %v589 = vadd.f32 0.0, %v588
    %590 = vmatmul.f32.gmra.mxu0 %v527
    %v591 = vpop.f32.mrf.mxu0
    %v592 = vadd.f32 0.0, %v591
    %593 = vmatmul.f32.gmra.mxu0 %v530
    %v594 = vpop.f32.mrf.mxu0
    %v595 = vadd.f32 0.0, %v594
    %596 = vmatmul.f32.gmra.mxu0 %v533
    %v597 = vpop.f32.mrf.mxu0
    %v598 = vadd.f32 0.0, %v597
    %599 = vmatmul.f32.gmra.mxu0 %v536
    %v600 = vpop.f32.mrf.mxu0
    %v601 = vadd.f32 0.0, %v600
    %602 = vmatmul.f32.gmra.mxu0 %v539
    %v603 = vpop.f32.mrf.mxu0
    %v604 = vadd.f32 0.0, %v603
    %605 = vmatmul.f32.gmra.mxu0 %v542
    %v606 = vpop.f32.mrf.mxu0
    %v607 = vadd.f32 0.0, %v606
    %608 = vmatmul.f32.gmra.mxu0 %v545
    %v609 = vpop.f32.mrf.mxu0
    %v610 = vadd.f32 0.0, %v609
    %611 = vmatmul.f32.gmra.mxu0 %v548
    %v612 = vpop.f32.mrf.mxu0
    %v613 = vadd.f32 0.0, %v612
    %614 = vmatmul.f32.gmra.mxu0 %v551
    %v615 = vpop.f32.mrf.mxu0
    %v616 = vadd.f32 0.0, %v615
    %617 = vmatmul.f32.gmra.mxu0 %v554
    %v618 = vpop.f32.mrf.mxu0
    %v619 = vadd.f32 0.0, %v618
    %620 = vdwg.mxu0
    %v621 = vmul.f32 %v251, %v574
    %v622 = vmul.f32 %v252, %v577
    %v623 = vmul.f32 %v253, %v580
    %v624 = vmul.f32 %v254, %v583
    %v625 = vmul.f32 %v255, %v586
    %v626 = vmul.f32 %v256, %v589
    %v627 = vmul.f32 %v257, %v592
    %v628 = vmul.f32 %v258, %v595
    %v629 = vmul.f32 %v259, %v598
    %v630 = vmul.f32 %v260, %v601
    %v631 = vmul.f32 %v261, %v604
    %v632 = vmul.f32 %v262, %v607
    %v633 = vmul.f32 %v263, %v610
    %v634 = vmul.f32 %v264, %v613
    %v635 = vmul.f32 %v265, %v616
    %v636 = vmul.f32 %v266, %v619
    %v637 = vld [vmem:[#allocation2] sm:$0x1]
    %v639 = vperm.slane %v637, 0
    %v641 = vmul.f32 %v621, %v639
    %v642 = vmul.f32 %v622, %v639
    %v643 = vmul.f32 %v623, %v639
    %v644 = vmul.f32 %v624, %v639
    %v645 = vmul.f32 %v625, %v639
    %v646 = vmul.f32 %v626, %v639
    %v647 = vmul.f32 %v627, %v639
    %v648 = vmul.f32 %v628, %v639
    %v649 = vmul.f32 %v629, %v639
    %v650 = vmul.f32 %v630, %v639
    %v651 = vmul.f32 %v631, %v639
    %v652 = vmul.f32 %v632, %v639
    %v653 = vmul.f32 %v633, %v639
    %v654 = vmul.f32 %v634, %v639
    %v655 = vmul.f32 %v635, %v639
    %v656 = vmul.f32 %v636, %v639
    %v657 = vld [vmem:[%s2] sm:$0x1]
    %v659 = vperm.slane %v657, 0
    %v661 = vadd.f32 %v641, %v659
    %v662 = vadd.f32 %v642, %v659
    %v663 = vadd.f32 %v643, %v659
    %v664 = vadd.f32 %v644, %v659
    %v665 = vadd.f32 %v645, %v659
    %v666 = vadd.f32 %v646, %v659
    %v667 = vadd.f32 %v647, %v659
    %v668 = vadd.f32 %v648, %v659
    %v669 = vadd.f32 %v649, %v659
    %v670 = vadd.f32 %v650, %v659
    %v671 = vadd.f32 %v651, %v659
    %v672 = vadd.f32 %v652, %v659
    %v673 = vadd.f32 %v653, %v659
    %v674 = vadd.f32 %v654, %v659
    %v675 = vadd.f32 %v655, %v659
    %v676 = vadd.f32 %v656, %v659
    %677 = vst [vmem:[#allocation5] sm:$0xff] %v661
    %678 = vst [vmem:[#allocation5 + $0x8] sm:$0xff] %v662
    %679 = vst [vmem:[#allocation5 + $0x10] sm:$0xff] %v663
    %680 = vst [vmem:[#allocation5 + $0x18] sm:$0xff] %v664
    %681 = vst [vmem:[#allocation5 + $0x20] sm:$0xff] %v665
    %682 = vst [vmem:[#allocation5 + $0x28] sm:$0xff] %v666
    %683 = vst [vmem:[#allocation5 + $0x30] sm:$0xff] %v667
    %684 = vst [vmem:[#allocation5 + $0x38] sm:$0xff] %v668
    %685 = vst [vmem:[#allocation5 + $0x40] sm:$0xff] %v669
    %686 = vst [vmem:[#allocation5 + $0x48] sm:$0xff] %v670
    %687 = vst [vmem:[#allocation5 + $0x50] sm:$0xff] %v671
    %688 = vst [vmem:[#allocation5 + $0x58] sm:$0xff] %v672
    %689 = vst [vmem:[#allocation5 + $0x60] sm:$0xff] %v673
    %690 = vst [vmem:[#allocation5 + $0x68] sm:$0xff] %v674
    %691 = vst [vmem:[#allocation5 + $0x70] sm:$0xff] %v675
    %692 = vst [vmem:[#allocation5 + $0x78] sm:$0xff] %v676
    // Predicated region
    $region26: #{tpu_custom_call.1} parent=1 // pred_check
      _
    $region27: #{tpu_custom_call.1} parent=1 // pred_check_branch
      %694 = sbr.rel (0) target = $region29
    $region28: #{tpu_custom_call.1} parent=1 // pred_region
      %696 = vsyncadd [#allocation4], 0
      %s697 = sshll.u32 [#allocation5], 4
      %s698 = int_to_ptr.vmem [resolvable:$true] %s697
      %s699 = sshll.u32 %s5, 4
      %s700 = int_to_ptr.hbm [resolvable:$true] %s699
      %705 = dma.vmem_to_hbm [thread:$0]  %s698, 2048, %s700, [#allocation4], 128, 128, 8
    $region29: #{tpu_custom_call.1} parent=1 // pred_fallthru
      _
    // Predicated region
    $region30: #{tpu_custom_call.1} parent=1 // pred_check
      _
    $region31: #{tpu_custom_call.1} parent=1 // pred_check_branch
      %707 = sbr.rel (0) target = $region33
    $region32: #{tpu_custom_call.1} parent=1 // pred_region
      %709 = dma.done [#allocation4], 2048
    $region33: #{tpu_custom_call.1} parent=1 // pred_fallthru
      _
    %710 = vsyncpa [#allocation3], 1
    %711 = vsyncpa [#allocation4], 1

</llo_original>
